<compile_context>
chip_gen: v6e
topology: v6e:2x2x1
jax: 0.10.0
libtpu: 0.0.40
codegen_flags: <defaults>
</compile_context>

<pallas_src>
import functools

import jax
import jax.numpy as jnp
from jax.experimental import pallas as pl
from jax.experimental.pallas import tpu as pltpu


def _cnn_kernel(x_ref, wp_ref, bias_ref, w2_ref, out_ref, acc_ref, *,
                inv_t, num_class):
    """Grid is (batch_tiles, time_tiles); time is the (inner) reduction axis."""
    t = pl.program_id(1)

    @pl.when(t == 0)
    def _init():
        acc_ref[...] = jnp.zeros_like(acc_ref)

    # Running sum over the (zero-)padded time axis for this batch tile.
    acc_ref[...] += jnp.sum(x_ref[...], axis=1)              # (tb, F)

    @pl.when(t == pl.num_programs(1) - 1)
    def _finalize():
        bvals = bias_ref[...]                                # (2, C)
        m = acc_ref[...] * inv_t                             # mean over padded T
        # Folded Conv1d(k=1) + fc1, then ReLU.
        h = jnp.maximum(
            jnp.dot(m, wp_ref[...], preferred_element_type=jnp.float32)
            + bvals[0:1, :],
            0.0,
        )                                                    # (tb, C)
        # TODO(synk): F.dropout(training=True) not implemented (identity in eval).
        out_ref[...] = (
            jnp.dot(h, w2_ref[...], preferred_element_type=jnp.float32)
            + bvals[1:2, 0:num_class]
        )                                                    # (tb, K)


def _batch_tile(batch, max_tile=128):
    """Batch tile for the parallel batch grid axis.  The output block is
    (tb, K), so tb must be a multiple of 8 (sublane) or equal the full batch."""
    if batch % 8 != 0:
        return batch
    tb = 8
    while tb * 2 <= min(batch, max_tile) and batch % (tb * 2) == 0:
        tb *= 2
    return tb


def _time_tile(t_len, batch_tile, dim_feat, budget_bytes=4 << 20):
    """Largest time tile (multiple of 8) whose double-buffered x block fits a
    conservative VMEM budget (well under v5e's 16 MiB scoped default; fine for
    v6e's 32 MiB default and v7x's 64 MiB physical VMEM)."""
    bytes_per_frame = 2 * batch_tile * dim_feat * 4          # x2: double buffering
    tt = max(8, (budget_bytes // max(bytes_per_frame, 1)) // 8 * 8)
    t_pad8 = pl.cdiv(t_len, 8) * 8
    return int(min(tt, t_pad8, 1024))


def fold_params(params):
    """Fold conv(k=1)+fc1 offline and pack the two bias rows into one operand."""
    wc, bc, w1, b1, w2, b2 = params                          # PyTorch layouts
    num_channel = w1.shape[0]
    num_class = w2.shape[0]
    assert num_class <= num_channel, "bias packing assumes num_class <= num_channel"
    wp = wc.T @ w1.T                                         # (F, C)
    bp = bc @ w1.T + b1                                      # (C,)
    biases = jnp.zeros((2, num_channel), jnp.float32)
    biases = biases.at[0, :].set(bp)
    biases = biases.at[1, :num_class].set(b2)
    return wp, biases, w2.T                                  # (F,C), (2,C), (C,K)


def cnn_forward(x_padded, params, *, time_tile=None):
    """x_padded: (B, T, F) float32 (zero-padded like pad_sequence).
    params: PyTorch-layout (wc, bc, w1, b1, w2, b2)."""
    wp, biases, w2t = fold_params(params)
    B, T, F = x_padded.shape
    C = wp.shape[1]
    K = w2t.shape[1]

    tb = _batch_tile(B)
    tt = time_tile if time_tile is not None else _time_tile(T, tb, F)
    tt = max(8, (int(tt) // 8) * 8)
    t_pad = pl.cdiv(T, tt) * tt
    if t_pad != T:
        # Extra zero frames do not change the time-sum; the mean still divides
        # by the original padded length T (matching torch.mean over dim=2).
        x_padded = jnp.pad(x_padded, ((0, 0), (0, t_pad - T), (0, 0)))

    nb = B // tb
    nt = t_pad // tt

    # Advisory cost hint so XLA can overlap this small call with neighbors.
    cost = pl.CostEstimate(
        flops=int(2 * B * t_pad * F + 2 * B * F * C + 2 * B * C * K),
        transcendentals=0,
        bytes_accessed=int(4 * (B * t_pad * F + F * C + 2 * C + C * K + B * K)),
    )

    kernel = functools.partial(_cnn_kernel, inv_t=1.0 / T, num_class=K)

    return pl.pallas_call(
        kernel,
        out_shape=jax.ShapeDtypeStruct((B, K), jnp.float32),
        grid_spec=pltpu.PrefetchScalarGridSpec(
            num_scalar_prefetch=0,
            grid=(nb, nt),
            in_specs=[
                pl.BlockSpec((tb, tt, F), lambda b, t: (b, t, 0)),  # x time-tile
                pl.BlockSpec((F, C), lambda b, t: (0, 0)),          # folded conv+fc1 W
                pl.BlockSpec((2, C), lambda b, t: (0, 0)),          # packed biases
                pl.BlockSpec((C, K), lambda b, t: (0, 0)),          # fc2 weight
            ],
            out_specs=pl.BlockSpec((tb, K), lambda b, t: (b, 0)),
            scratch_shapes=[pltpu.VMEM((tb, F), jnp.float32)],       # time-sum acc
        ),
        compiler_params=pltpu.CompilerParams(
            dimension_semantics=("parallel", "arbitrary")),
        cost_estimate=cost,
    )(x_padded, wp, biases, w2t)


def init_params(key, dim_feat, num_channel, num_class):
    """Deterministic synthetic parameters in native PyTorch layouts."""
    k = jax.random.split(key, 6)
    # nn.Conv1d(dim_feat, num_channel, 1): weight (C, F[, 1]), bias (C,)
    wc = jax.random.normal(k[0], (num_channel, dim_feat), jnp.float32)
    wc = wc / jnp.sqrt(jnp.float32(dim_feat))
    bc = jax.random.normal(k[1], (num_channel,), jnp.float32) * 0.01
    # nn.Linear(C, C)
    w1 = jax.random.normal(k[2], (num_channel, num_channel), jnp.float32)
    w1 = w1 / jnp.sqrt(jnp.float32(num_channel))
    b1 = jax.random.normal(k[3], (num_channel,), jnp.float32) * 0.01
    # nn.Linear(C, num_class)
    w2 = jax.random.normal(k[4], (num_class, num_channel), jnp.float32)
    w2 = w2 / jnp.sqrt(jnp.float32(num_channel))
    b2 = jax.random.normal(k[5], (num_class,), jnp.float32) * 0.01
    return wc, bc, w1, b1, w2, b2


def reference_forward(x_padded, params):
    """Unfused reference mirroring the PyTorch op order exactly."""
    wc, bc, w1, b1, w2, b2 = params
    y = jnp.einsum("btf,cf->btc", x_padded, wc) + bc    # Conv1d(k=1) on NCW
    m = jnp.mean(y, axis=1)                             # mean over padded time
    h = jnp.maximum(m @ w1.T + b1, 0.0)
    return h @ w2.T + b2


if __name__ == "__main__":
    # Small shapes consistent with the module's forward.
    B, T = 4, 40                       # batch, padded sequence length
    dim_feat, num_channel, num_class = 23, 32, 4

    key = jax.random.PRNGKey(0)
    kx, kp = jax.random.split(key)

    # Variable-length sequences, zero-padded (pad_sequence(batch_first=True)).
    lengths = [40, 31, 20, 9]
    x = jax.random.normal(kx, (B, T, dim_feat), jnp.float32)
    time_idx = jnp.arange(T)[None, :, None]                      # (1, T, 1)
    len_arr = jnp.asarray(lengths, jnp.int32)[:, None, None]     # (B, 1, 1)
    x_padded = jnp.where(time_idx < len_arr, x, 0.0)

    params = init_params(kp, dim_feat, num_channel, num_class)

    # time_tile=16 -> 3 time-grid steps (exercises init/accumulate/finalize
    # and the zero-pad tail tile); at production T the auto tile sizer is used.
    out = cnn_forward(x_padded, params, time_tile=16)
    out = jax.block_until_ready(out)

    ref = reference_forward(x_padded, params)
    assert out.shape == (B, num_class)
    assert jnp.allclose(out, ref, rtol=1e-4, atol=1e-4), "mismatch vs reference"

    print("KERNEL_OK")
</pallas_src>

<mosaic_0001>
module attributes {stable_mosaic.version = 11 : i64} {
  func.func @_cnn_kernel(%arg0: i32, %arg1: i32, %arg2: memref<4x16x23xf32, #tpu.memory_space<vmem>>, %arg3: memref<23x32xf32, #tpu.memory_space<vmem>>, %arg4: memref<2x32xf32, #tpu.memory_space<vmem>>, %arg5: memref<32x4xf32, #tpu.memory_space<vmem>>, %arg6: memref<4x4xf32, #tpu.memory_space<vmem>>, %arg7: memref<4x23xf32, #tpu.memory_space<vmem>>) attributes {dimension_semantics = [#tpu.dimension_semantics<parallel>, #tpu.dimension_semantics<arbitrary>], iteration_bounds = array<i64: 1, 3>, scalar_prefetch = 0 : i64, scratch_operands = 1 : i64, tpu.core_type = #tpu.core_type<tc>, window_params = [{transform_indices = @transform_0, window_bounds = array<i64: 4, 16, 23>}, {pipeline_mode = #tpu.pipeline_mode<synchronous>, transform_indices = @transform_1, window_bounds = array<i64: 23, 32>}, {pipeline_mode = #tpu.pipeline_mode<synchronous>, transform_indices = @transform_2, window_bounds = array<i64: 2, 32>}, {pipeline_mode = #tpu.pipeline_mode<synchronous>, transform_indices = @transform_3, window_bounds = array<i64: 32, 4>}, {transform_indices = @transform_4, window_bounds = array<i64: 4, 4>}]} {
    %c0_i32 = arith.constant 0 : i32
    %0 = arith.cmpi eq, %arg1, %c0_i32 : i32
    %1 = arith.extui %0 : i1 to i32
    %c0_i32_0 = arith.constant 0 : i32
    %2 = arith.cmpi ne, %1, %c0_i32_0 : i32
    scf.if %2 {
      %cst_8 = arith.constant 0.000000e+00 : f32
      %11 = vector.broadcast %cst_8 : f32 to vector<4x23xf32>
      %c0_9 = arith.constant 0 : index
      %c0_10 = arith.constant 0 : index
      %12 = vector.load %arg7[%c0_9, %c0_10] : memref<4x23xf32, #tpu.memory_space<vmem>>, vector<4x23xf32>
      tpu.vector_store %arg7[%c0_9, %c0_10], %11 {strides = array<i32>} : memref<4x23xf32, #tpu.memory_space<vmem>>, vector<4x23xf32>,
    } else {
    }
    %c0 = arith.constant 0 : index
    %c0_1 = arith.constant 0 : index
    %3 = vector.load %arg7[%c0, %c0_1] : memref<4x23xf32, #tpu.memory_space<vmem>>, vector<4x23xf32>
    %c0_2 = arith.constant 0 : index
    %c0_3 = arith.constant 0 : index
    %c0_4 = arith.constant 0 : index
    %4 = vector.load %arg2[%c0_2, %c0_3, %c0_4] : memref<4x16x23xf32, #tpu.memory_space<vmem>>, vector<4x16x23xf32>
    %cst = arith.constant dense<0.000000e+00> : vector<4x23xf32>
    %5 = vector.multi_reduction <add>, %4, %cst [1] : vector<4x16x23xf32> to vector<4x23xf32>
    %6 = arith.addf %3, %5 : vector<4x23xf32>
    %c0_5 = arith.constant 0 : index
    %c0_6 = arith.constant 0 : index
    %7 = vector.load %arg7[%c0_5, %c0_6] : memref<4x23xf32, #tpu.memory_space<vmem>>, vector<4x23xf32>
    tpu.vector_store %arg7[%c0_5, %c0_6], %6 {strides = array<i32>} : memref<4x23xf32, #tpu.memory_space<vmem>>, vector<4x23xf32>,
    %c2_i32 = arith.constant 2 : i32
    %8 = arith.cmpi eq, %arg1, %c2_i32 : i32
    %9 = arith.extui %8 : i1 to i32
    %c0_i32_7 = arith.constant 0 : i32
    %10 = arith.cmpi ne, %9, %c0_i32_7 : i32
    scf.if %10 {
      %c0_8 = arith.constant 0 : index
      %c0_9 = arith.constant 0 : index
      %11 = vector.load %arg4[%c0_8, %c0_9] : memref<2x32xf32, #tpu.memory_space<vmem>>, vector<2x32xf32>
      %c0_10 = arith.constant 0 : index
      %c0_11 = arith.constant 0 : index
      %12 = vector.load %arg7[%c0_10, %c0_11] : memref<4x23xf32, #tpu.memory_space<vmem>>, vector<4x23xf32>
      %cst_12 = arith.constant 2.500000e-02 : f32
      %13 = vector.broadcast %cst_12 : f32 to vector<4x23xf32>
      %14 = arith.mulf %12, %13 : vector<4x23xf32>
      %c0_13 = arith.constant 0 : index
      %c0_14 = arith.constant 0 : index
      %15 = vector.load %arg3[%c0_13, %c0_14] : memref<23x32xf32, #tpu.memory_space<vmem>>, vector<23x32xf32>
      %cst_15 = arith.constant dense<0.000000e+00> : vector<4x32xf32>
      %16 = tpu.matmul %14, %15, %cst_15 {dimension_numbers = #tpu.dot_dimension_numbers<[1], [0], [0], [1], [0, 0, 1, 1], [], []>} : vector<4x23xf32>, vector<23x32xf32>, vector<4x32xf32> -> vector<4x32xf32>
      %17 = vector.extract_strided_slice %11 {offsets = [0, 0], sizes = [1, 32], strides = [1, 1]} : vector<2x32xf32> to vector<1x32xf32>
      %18 = vector.broadcast %17 : vector<1x32xf32> to vector<4x32xf32>
      %19 = arith.addf %16, %18 : vector<4x32xf32>
      %cst_16 = arith.constant 0.000000e+00 : f32
      %20 = vector.broadcast %cst_16 : f32 to vector<4x32xf32>
      %21 = arith.maximumf %19, %20 : vector<4x32xf32>
      %c0_17 = arith.constant 0 : index
      %c0_18 = arith.constant 0 : index
      %22 = vector.load %arg5[%c0_17, %c0_18] : memref<32x4xf32, #tpu.memory_space<vmem>>, vector<32x4xf32>
      %cst_19 = arith.constant dense<0.000000e+00> : vector<4x4xf32>
      %23 = tpu.matmul %21, %22, %cst_19 {dimension_numbers = #tpu.dot_dimension_numbers<[1], [0], [0], [1], [0, 0, 1, 1], [], []>} : vector<4x32xf32>, vector<32x4xf32>, vector<4x4xf32> -> vector<4x4xf32>
      %24 = vector.extract_strided_slice %11 {offsets = [1, 0], sizes = [1, 4], strides = [1, 1]} : vector<2x32xf32> to vector<1x4xf32>
      %25 = vector.broadcast %24 : vector<1x4xf32> to vector<4x4xf32>
      %26 = arith.addf %23, %25 : vector<4x4xf32>
      %c0_20 = arith.constant 0 : index
      %c0_21 = arith.constant 0 : index
      %27 = vector.load %arg6[%c0_20, %c0_21] : memref<4x4xf32, #tpu.memory_space<vmem>>, vector<4x4xf32>
      tpu.vector_store %arg6[%c0_20, %c0_21], %26 {strides = array<i32>} : memref<4x4xf32, #tpu.memory_space<vmem>>, vector<4x4xf32>,
    } else {
    }
    return
  }
  func.func @transform_0(%arg0: i32, %arg1: i32) -> (i32, i32, i32) {
    %c0_i32 = arith.constant 0 : i32
    %c0_i32_0 = arith.constant 0 : i32
    return %arg0, %arg1, %c0_i32 : i32, i32, i32
  }
  func.func @transform_1(%arg0: i32, %arg1: i32) -> (i32, i32) {
    %c0_i32 = arith.constant 0 : i32
    %c0_i32_0 = arith.constant 0 : i32
    %c0_i32_1 = arith.constant 0 : i32
    return %c0_i32, %c0_i32_0 : i32, i32
  }
  func.func @transform_2(%arg0: i32, %arg1: i32) -> (i32, i32) {
    %c0_i32 = arith.constant 0 : i32
    %c0_i32_0 = arith.constant 0 : i32
    %c0_i32_1 = arith.constant 0 : i32
    return %c0_i32, %c0_i32_0 : i32, i32
  }
  func.func @transform_3(%arg0: i32, %arg1: i32) -> (i32, i32) {
    %c0_i32 = arith.constant 0 : i32
    %c0_i32_0 = arith.constant 0 : i32
    %c0_i32_1 = arith.constant 0 : i32
    return %c0_i32, %c0_i32_0 : i32, i32
  }
  func.func @transform_4(%arg0: i32, %arg1: i32) -> (i32, i32) {
    %c0_i32 = arith.constant 0 : i32
    %c0_i32_0 = arith.constant 0 : i32
    return %arg0, %c0_i32 : i32, i32
  }
}

</mosaic_0001>

<llo_original>
// kernel: tpu_custom_call.1
$region0: #{tpu_custom_call.1}
  #allocation0 [shape = 'u32[]', space=smem, size = 0x4, offset = 0x4, fixed_abs, tag = 'smem constant byte address 0x4 - core index']
  #allocation1 [shape = 'u32[144,128]{1,0:T(1,128)}', space=vmem, size = 0x12000, scoped, tag = 'internal scratch']
  #allocation2 [shape = 'f32[4,23]{1,0:T(4,128)}', space=vmem, size = 0x800, scoped, tag = 'scratch operand']
  %s0 = inlined_call_operand.vmem [shape: f32[4,48,23], index: 0, kind: input, shape index: {}]
  %s1 = inlined_call_operand.vmem [shape: f32[23,32], index: 1, kind: input, shape index: {}]
  %s2 = inlined_call_operand.vmem [shape: f32[2,32], index: 2, kind: input, shape index: {}]
  %s3 = inlined_call_operand.vmem [shape: f32[32,4], index: 3, kind: input, shape index: {}]
  %s4 = inlined_call_operand.hbm [shape: f32[4,4], index: 4, kind: output, shape index: {}]
  %s5 = sld [smem:[#allocation0]]
  $region95: #{tpu_custom_call.1} parent=0
    _
  %s7 = ssub.s32 1, %s5
  %s8 = scalar_select 0, %s7, %s5
  $region1: #{tpu_custom_call.1} parent=0
    #allocation3 [shape = 'u8[65536]{0}', space=vmem, size = 0x10000, scoped, tag = 'input window, operand 0']
    #allocation4 [shape = 'u8[2048]{0}', space=vmem, size = 0x800, scoped, tag = 'output window, operand 0, single buffered']
    #allocation5 [shape = 's32[2]{0}', space=sflag, size = 0x8, scoped, tag = 'scoped memory for tpu_custom_call.1']
    %9 = vsyncpa [#allocation5], 0
    loop: start=0, step=1, limit=5
    $region2: #{tpu_custom_call.1} parent=1 // loop_pre_header
      _
    $region3: #{tpu_custom_call.1} parent=1 // loop_header
      %s11 = sphi 0, %s15
      %p12 = scmp.ge.s32.totalorder %s11, 5
      %s18 = sphi 0, %s30
      %s19 = sphi 0, %s26
      %s20 = sphi 0, %s18
      %s21 = sphi 0, %s19
      %s22 = sphi 0, %s20
      %s23 = sphi 0, %s21
      %s35 = sphi 0, %s37
      %s38 = sphi 0, %s35
      %s39 = sphi 0, %s38
      %s55 = sphi 0, %s39
      %s59 = sphi 0, %s59
      %s61 = sphi 0, %s59
      %s62 = sphi 0, %s61
      %s76 = sphi 0, %s62
      %s80 = sphi 0, %s80
      %s82 = sphi 0, %s80
      %s83 = sphi 0, %s82
      %s97 = sphi 0, %s83
      %s101 = sphi 0, %s101
      %s103 = sphi 0, %s101
      %s104 = sphi 0, %s103
      %s118 = sphi 0, %s104
      %s124 = sphi 0, %s126
      %s127 = sphi 0, %s124
      %s128 = sphi 0, %s127
      %s144 = sphi 0, %s128
    $region4: #{tpu_custom_call.1} parent=1 // loop_header_branch
      %14 = sbr.rel (%p12) target = $region8
    $region5: #{tpu_custom_call.1} parent=1 // loop_body
      %s16 = ssub.s32 %s11, 1
      %s17 = ssub.s32 %s11, 2
      %s24 = sadd.s32 1, %s19
      %p25 = scmp.ge.s32.totalorder %s24, 3
      %s26 = scalar_select %p25, 0, %s24
      %s27 = sadd.s32 1, %s18
      %s28 = scalar_select %p25, %s27, %s18
      %p29 = scmp.ge.s32.totalorder %s28, 1
      %s30 = scalar_select %p29, 0, %s28
      %s31 = ssub.s32 %s18, %s30
      %s32 = ssub.s32 %s19, %s26
      %s33 = sor.u32 %s31, %s32
      %p34 = scmp.eq.s32.totalorder %s33, 0
      %s36 = sadd.s32 %s35, 1
      %s37 = scalar_select %p34, %s35, %s36
      %p40 = pneg %p34
      %p41 = scmp.eq.s32.totalorder %s11, 2
      %p42 = por %p40, %p41
      %p43 = scmp.ne.s32.totalorder %s35, %s38
      %p44 = scmp.eq.s32.totalorder %s11, 0
      %p45 = por %p43, %p44
      %p46 = scmp.ne.s32.totalorder %s35, %s38
      %p47 = scmp.eq.s32.totalorder %s16, 2
      %p48 = por %p46, %p47
      %p49 = scmp.ne.s32.totalorder %s38, %s39
      %p50 = scmp.eq.s32.totalorder %s16, 0
      %p51 = por %p49, %p50
      %p52 = scmp.ne.s32.totalorder %s38, %s39
      %p53 = scmp.eq.s32.totalorder %s17, 2
      %p54 = por %p52, %p53
      %p56 = scmp.ne.s32.totalorder %s39, %s55
      %p57 = scmp.eq.s32.totalorder %s17, 0
      %p58 = por %p56, %p57
      %s60 = sadd.s32 %s59, 1
      %p63 = scmp.eq.s32.totalorder %s11, 2
      %p64 = scmp.ne.s32.totalorder %s59, %s61
      %p65 = scmp.eq.s32.totalorder %s11, 0
      %p66 = por %p64, %p65
      %p67 = scmp.ne.s32.totalorder %s59, %s61
      %p68 = scmp.eq.s32.totalorder %s16, 2
      %p69 = por %p67, %p68
      %p70 = scmp.ne.s32.totalorder %s61, %s62
      %p71 = scmp.eq.s32.totalorder %s16, 0
      %p72 = por %p70, %p71
      %p73 = scmp.ne.s32.totalorder %s61, %s62
      %p74 = scmp.eq.s32.totalorder %s17, 2
      %p75 = por %p73, %p74
      %p77 = scmp.ne.s32.totalorder %s62, %s76
      %p78 = scmp.eq.s32.totalorder %s17, 0
      %p79 = por %p77, %p78
      %s81 = sadd.s32 %s80, 1
      %p84 = scmp.eq.s32.totalorder %s11, 2
      %p85 = scmp.ne.s32.totalorder %s80, %s82
      %p86 = scmp.eq.s32.totalorder %s11, 0
      %p87 = por %p85, %p86
      %p88 = scmp.ne.s32.totalorder %s80, %s82
      %p89 = scmp.eq.s32.totalorder %s16, 2
      %p90 = por %p88, %p89
      %p91 = scmp.ne.s32.totalorder %s82, %s83
      %p92 = scmp.eq.s32.totalorder %s16, 0
      %p93 = por %p91, %p92
      %p94 = scmp.ne.s32.totalorder %s82, %s83
      %p95 = scmp.eq.s32.totalorder %s17, 2
      %p96 = por %p94, %p95
      %p98 = scmp.ne.s32.totalorder %s83, %s97
      %p99 = scmp.eq.s32.totalorder %s17, 0
      %p100 = por %p98, %p99
      %s102 = sadd.s32 %s101, 1
      %p105 = scmp.eq.s32.totalorder %s11, 2
      %p106 = scmp.ne.s32.totalorder %s101, %s103
      %p107 = scmp.eq.s32.totalorder %s11, 0
      %p108 = por %p106, %p107
      %p109 = scmp.ne.s32.totalorder %s101, %s103
      %p110 = scmp.eq.s32.totalorder %s16, 2
      %p111 = por %p109, %p110
      %p112 = scmp.ne.s32.totalorder %s103, %s104
      %p113 = scmp.eq.s32.totalorder %s16, 0
      %p114 = por %p112, %p113
      %p115 = scmp.ne.s32.totalorder %s103, %s104
      %p116 = scmp.eq.s32.totalorder %s17, 2
      %p117 = por %p115, %p116
      %p119 = scmp.ne.s32.totalorder %s104, %s118
      %p120 = scmp.eq.s32.totalorder %s17, 0
      %p121 = por %p119, %p120
      %s122 = ssub.s32 %s18, %s30
      %p123 = scmp.eq.s32.totalorder %s122, 0
      %s125 = sadd.s32 %s124, 1
      %s126 = scalar_select %p123, %s124, %s125
      %p129 = pneg %p123
      %p130 = scmp.eq.s32.totalorder %s11, 2
      %p131 = por %p129, %p130
      %p132 = scmp.ne.s32.totalorder %s124, %s127
      %p133 = scmp.eq.s32.totalorder %s11, 0
      %p134 = por %p132, %p133
      %p135 = scmp.ne.s32.totalorder %s124, %s127
      %p136 = scmp.eq.s32.totalorder %s16, 2
      %p137 = por %p135, %p136
      %p138 = scmp.ne.s32.totalorder %s127, %s128
      %p139 = scmp.eq.s32.totalorder %s16, 0
      %p140 = por %p138, %p139
      %p141 = scmp.ne.s32.totalorder %s127, %s128
      %p142 = scmp.eq.s32.totalorder %s17, 2
      %p143 = por %p141, %p142
      %p145 = scmp.ne.s32.totalorder %s128, %s144
      %p146 = scmp.eq.s32.totalorder %s17, 0
      %p147 = por %p145, %p146
      %p148 = scmp.le.s32.totalorder 1, %s11
      %p149 = scmp.lt.s32.totalorder %s11, 4
      %p150 = pnand %p148, %p149
      %p151 = pneg %p150
      // Predicated region
      $region9: #{tpu_custom_call.1} parent=5 // pred_check
        _
      $region10: #{tpu_custom_call.1} parent=5 // pred_check_branch
        %153 = sbr.rel (%p150) target = $region12
      $region11: #{tpu_custom_call.1} parent=5 // pred_region
        %s154 = ssub.s32 %s11, 1
        // Predicated region
        $region13: #{tpu_custom_call.1} parent=11 // pred_check
          %p155 = pneg %p72
        $region14: #{tpu_custom_call.1} parent=11 // pred_check_branch
          %157 = sbr.rel (%p155) target = $region16
        $region15: #{tpu_custom_call.1} parent=11 // pred_region
          _
        $region16: #{tpu_custom_call.1} parent=11 // pred_fallthru
          _
        // Predicated region
        $region17: #{tpu_custom_call.1} parent=11 // pred_check
          %p158 = pneg %p93
        $region18: #{tpu_custom_call.1} parent=11 // pred_check_branch
          %160 = sbr.rel (%p158) target = $region20
        $region19: #{tpu_custom_call.1} parent=11 // pred_region
          _
        $region20: #{tpu_custom_call.1} parent=11 // pred_fallthru
          _
        // Predicated region
        $region21: #{tpu_custom_call.1} parent=11 // pred_check
          %p161 = pneg %p114
        $region22: #{tpu_custom_call.1} parent=11 // pred_check_branch
          %163 = sbr.rel (%p161) target = $region24
        $region23: #{tpu_custom_call.1} parent=11 // pred_region
          _
        $region24: #{tpu_custom_call.1} parent=11 // pred_fallthru
          _
      $region12: #{tpu_custom_call.1} parent=5 // pred_fallthru
        _
      %p164 = scmp.lt.s32.totalorder %s11, 3
      // Predicated region
      $region25: #{tpu_custom_call.1} parent=5 // pred_check
        %p165 = pneg %p164
      $region26: #{tpu_custom_call.1} parent=5 // pred_check_branch
        %167 = sbr.rel (%p165) target = $region28
      $region27: #{tpu_custom_call.1} parent=5 // pred_region
        // Predicated region
        $region29: #{tpu_custom_call.1} parent=27 // pred_check
          %p168 = pneg %p45
        $region30: #{tpu_custom_call.1} parent=27 // pred_check_branch
          %170 = sbr.rel (%p168) target = $region32
        $region31: #{tpu_custom_call.1} parent=27 // pred_region
          %s171 = sand.u32 %s35, 1
          %s172 = sand.u32 %s35, 1
          %s173 = smul.addr %s172, 64
          %s174 = scalar_lea.vmem [#allocation3], %s173
          %s175 = smul.u32 4, %s18
          %s176 = smul.u32 2, %s19
          %s177 = smul.addr %s175, 6
          %s178 = sadd.s32 %s176, %s177
          %s179 = smul.addr %s178, 8
          %s180 = scalar_lea.vmem %s0, %s179
          // Predicated region
          $region33: #{tpu_custom_call.1} parent=31 // pred_check
            _
          $region34: #{tpu_custom_call.1} parent=31 // pred_check_branch
            %182 = sbr.rel (0) target = $region36
          $region35: #{tpu_custom_call.1} parent=31 // pred_region
            // Predicated region
            $region37: #{tpu_custom_call.1} parent=35 // pred_check
              _
            $region38: #{tpu_custom_call.1} parent=35 // pred_check_branch
              %184 = sbr.rel (0) target = $region40
            $region39: #{tpu_custom_call.1} parent=35 // pred_region
              // Predicated region
              $region52: #{tpu_custom_call.1} parent=39 // pred_check
                _
              $region53: #{tpu_custom_call.1} parent=39 // pred_check_branch
                %214 = sbr.rel (0) target = $region55
              $region54: #{tpu_custom_call.1} parent=39 // pred_region
                loop: start=0, step=1, limit=1
                $region56: #{tpu_custom_call.1} parent=54 // loop_pre_header
                  _
                $region57: #{tpu_custom_call.1} parent=54 // loop_header
                  %s216 = sphi 0, %s220
                  %p217 = scmp.ge.s32.totalorder %s216, 1
                  %s221 = sphi %s180, %s180
                  %s222 = sphi %s174, %s174
                $region58: #{tpu_custom_call.1} parent=54 // loop_header_branch
                  %219 = sbr.rel (%p217) target = $region62
                $region59: #{tpu_custom_call.1} parent=54 // loop_body
                  %v223 = vld [vmem:[%s221] sm:$0xff]
                  %224 = vst [vmem:[%s222] sm:$0xff] %v223
                  %v225 = vld [vmem:[%s221 + $0x8] sm:$0xff]
                  %226 = vst [vmem:[%s222 + $0x8] sm:$0xff] %v225
                  %v227 = vld [vmem:[%s221 + $0x30] sm:$0xff]
                  %228 = vst [vmem:[%s222 + $0x10] sm:$0xff] %v227
                  %v229 = vld [vmem:[%s221 + $0x38] sm:$0xff]
                  %230 = vst [vmem:[%s222 + $0x18] sm:$0xff] %v229
                  %v231 = vld [vmem:[%s221 + $0x60] sm:$0xff]
                  %232 = vst [vmem:[%s222 + $0x20] sm:$0xff] %v231
                  %v233 = vld [vmem:[%s221 + $0x68] sm:$0xff]
                  %234 = vst [vmem:[%s222 + $0x28] sm:$0xff] %v233
                  %v235 = vld [vmem:[%s221 + $0x90] sm:$0xff]
                  %236 = vst [vmem:[%s222 + $0x30] sm:$0xff] %v235
                  %v237 = vld [vmem:[%s221 + $0x98] sm:$0xff]
                  %238 = vst [vmem:[%s222 + $0x38] sm:$0xff] %v237
                $region60: #{tpu_custom_call.1} parent=54 // loop_footer
                  %s220 = sadd.s32 1, %s216
                $region61: #{tpu_custom_call.1} parent=54 // loop_footer_branch
                  %215 = sbr.rel target = $region57
                $region62: #{tpu_custom_call.1} parent=54 // loop_exit
                  _
              $region55: #{tpu_custom_call.1} parent=39 // pred_fallthru
                _
              // Predicated region
              $region63: #{tpu_custom_call.1} parent=39 // pred_check
                _
              $region64: #{tpu_custom_call.1} parent=39 // pred_check_branch
                %240 = sbr.rel target = $region66
              $region65: #{tpu_custom_call.1} parent=39 // pred_region
                _
              $region66: #{tpu_custom_call.1} parent=39 // pred_fallthru
                _
            $region40: #{tpu_custom_call.1} parent=35 // pred_fallthru
              _
            // Predicated region
            $region41: #{tpu_custom_call.1} parent=35 // pred_check
              _
            $region42: #{tpu_custom_call.1} parent=35 // pred_check_branch
              %186 = sbr.rel target = $region44
            $region43: #{tpu_custom_call.1} parent=35 // pred_region
              %s188 = ssub.s32 256, 1
              loop: start=0, step=1, limit=1
              $region45: #{tpu_custom_call.1} parent=43 // loop_pre_header
                _
              $region46: #{tpu_custom_call.1} parent=43 // loop_header
                %s190 = sphi 0, %s194
                %p191 = scmp.ge.s32.totalorder %s190, 1
                %s195 = sphi %s180, %s180
                %s196 = sphi %s174, %s174
              $region47: #{tpu_custom_call.1} parent=43 // loop_header_branch
                %193 = sbr.rel (%p191) target = $region51
              $region48: #{tpu_custom_call.1} parent=43 // loop_body
                %v197 = vld [vmem:[%s195] sm:%s188]
                %198 = vst [vmem:[%s196] sm:%s188] %v197
                %v199 = vld [vmem:[%s195 + $0x8] sm:%s188]
                %200 = vst [vmem:[%s196 + $0x8] sm:%s188] %v199
                %v201 = vld [vmem:[%s195 + $0x30] sm:%s188]
                %202 = vst [vmem:[%s196 + $0x10] sm:%s188] %v201
                %v203 = vld [vmem:[%s195 + $0x38] sm:%s188]
                %204 = vst [vmem:[%s196 + $0x18] sm:%s188] %v203
                %v205 = vld [vmem:[%s195 + $0x60] sm:%s188]
                %206 = vst [vmem:[%s196 + $0x20] sm:%s188] %v205
                %v207 = vld [vmem:[%s195 + $0x68] sm:%s188]
                %208 = vst [vmem:[%s196 + $0x28] sm:%s188] %v207
                %v209 = vld [vmem:[%s195 + $0x90] sm:%s188]
                %210 = vst [vmem:[%s196 + $0x30] sm:%s188] %v209
                %v211 = vld [vmem:[%s195 + $0x98] sm:%s188]
                %212 = vst [vmem:[%s196 + $0x38] sm:%s188] %v211
              $region49: #{tpu_custom_call.1} parent=43 // loop_footer
                %s194 = sadd.s32 1, %s190
              $region50: #{tpu_custom_call.1} parent=43 // loop_footer_branch
                %189 = sbr.rel target = $region46
              $region51: #{tpu_custom_call.1} parent=43 // loop_exit
                _
            $region44: #{tpu_custom_call.1} parent=35 // pred_fallthru
              _
          $region36: #{tpu_custom_call.1} parent=31 // pred_fallthru
            _
          %241 = vnop
        $region32: #{tpu_custom_call.1} parent=27 // pred_fallthru
          _
      $region28: #{tpu_custom_call.1} parent=5 // pred_fallthru
        _
      %p242 = scmp.le.s32.totalorder 1, %s11
      %p243 = scmp.lt.s32.totalorder %s11, 4
      %p244 = pnand %p242, %p243
      %p245 = pneg %p244
      // Predicated region
      $region67: #{tpu_custom_call.1} parent=5 // pred_check
        _
      $region68: #{tpu_custom_call.1} parent=5 // pred_check_branch
        %247 = sbr.rel (%p244) target = $region70
      $region69: #{tpu_custom_call.1} parent=5 // pred_region
        %s248 = ssub.s32 %s11, 1
        %s249 = sand.u32 %s38, 1
        %s250 = sand.u32 %s38, 1
        %s251 = smul.addr %s250, 64
        %s252 = scalar_lea.vmem [#allocation3], %s251
        // Predicated region
        $region71: #{tpu_custom_call.1} parent=69 // pred_check
          %p253 = pneg %p51
        $region72: #{tpu_custom_call.1} parent=69 // pred_check_branch
          %255 = sbr.rel (%p253) target = $region74
        $region73: #{tpu_custom_call.1} parent=69 // pred_region
          _
        $region74: #{tpu_custom_call.1} parent=69 // pred_fallthru
          _
        %s256 = sand.u32 %s38, 1
        %s257 = sand.u32 %s38, 1
        %s258 = smul.addr %s257, 64
        %s259 = scalar_lea.vmem [#allocation3], %s258
        %p260 = pneg %p51
        %p261 = pneg %p48
        %p262 = pneg %p72
        %p263 = pneg %p69
        %p264 = pneg %p93
        %p265 = pneg %p90
        %p266 = pneg %p114
        %p267 = pneg %p111
        %p268 = pneg %p140
        %p269 = pneg %p137
        %s270 = smul.u32 4, %s20
        %s271 = smul.u32 2, %s21
        %p272 = scmp.eq.s32.totalorder %s21, 0
        // Predicated region
        $region75: #{tpu_custom_call.1} parent=69 // pred_check
          %p273 = pneg %p272
        $region76: #{tpu_custom_call.1} parent=69 // pred_check_branch
          %275 = sbr.rel (%p273) target = $region78
        $region77: #{tpu_custom_call.1} parent=69 // pred_region
          %vm276 = vcmask 183296
          %277 = vst.msk [vmem:[#allocation2] sm:$0xf] %vm276, 0.0
        $region78: #{tpu_custom_call.1} parent=69 // pred_fallthru
          _
        %v278 = vld [vmem:[#allocation2] sm:$0xf]
        %v279 = vld [vmem:[%s252] sm:$0xff]
        %v280 = vld [vmem:[%s252 + $0x8] sm:$0xff]
        %v281 = vld [vmem:[%s252 + $0x10] sm:$0xff]
        %v282 = vld [vmem:[%s252 + $0x18] sm:$0xff]
        %v283 = vld [vmem:[%s252 + $0x20] sm:$0xff]
        %v284 = vld [vmem:[%s252 + $0x28] sm:$0xff]
        %v285 = vld [vmem:[%s252 + $0x30] sm:$0xff]
        %v286 = vld [vmem:[%s252 + $0x38] sm:$0xff]
        %vm287 = vcmask 187392
        %v288 = vsel %vm287, %v279, 0.0
        %v289 = vsel %vm287, %v280, 0.0
        %v290 = vadd.f32 %v288, %v289
        %v291 = vrot.slane %v290, 4
        %v292 = vadd.f32 %v290, %v291
        %v293 = vrot.slane %v292, 2
        %v294 = vadd.f32 %v292, %v293
        %v295 = vrot.slane %v294, 1
        %v296 = vadd.f32 %v294, %v295
        %v297 = vsel %vm287, %v281, 0.0
        %v298 = vsel %vm287, %v282, 0.0
        %v299 = vadd.f32 %v297, %v298
        %v300 = vrot.slane %v299, 4
        %v301 = vadd.f32 %v299, %v300
        %v302 = vrot.slane %v301, 2
        %v303 = vadd.f32 %v301, %v302
        %v304 = vrot.slane %v303, 1
        %v305 = vadd.f32 %v303, %v304
        %v306 = vsel %vm287, %v283, 0.0
        %v307 = vsel %vm287, %v284, 0.0
        %v308 = vadd.f32 %v306, %v307
        %v309 = vrot.slane %v308, 4
        %v310 = vadd.f32 %v308, %v309
        %v311 = vrot.slane %v310, 2
        %v312 = vadd.f32 %v310, %v311
        %v313 = vrot.slane %v312, 1
        %v314 = vadd.f32 %v312, %v313
        %v315 = vsel %vm287, %v285, 0.0
        %v316 = vsel %vm287, %v286, 0.0
        %v317 = vadd.f32 %v315, %v316
        %v318 = vrot.slane %v317, 4
        %v319 = vadd.f32 %v317, %v318
        %v320 = vrot.slane %v319, 2
        %v321 = vadd.f32 %v319, %v320
        %v322 = vrot.slane %v321, 1
        %v323 = vadd.f32 %v321, %v322
        %vm328 = vcmask 1041409
        %v329 = vsel %vm328, %v305, %v296
        %vm330 = vcmask 1042434
        %v331 = vsel %vm330, %v314, %v329
        %vm332 = vcmask 1043459
        %v333 = vsel %vm332, %v323, %v331
        %v335 = vadd.f32 %v278, %v333
        %vm336 = vcmask 183296
        %337 = vst.msk [vmem:[#allocation2] sm:$0xf] %vm336, %v335
        %p338 = scmp.eq.s32.totalorder %s21, 2
        // Predicated region
        $region79: #{tpu_custom_call.1} parent=69 // pred_check
          %p339 = pneg %p338
        $region80: #{tpu_custom_call.1} parent=69 // pred_check_branch
          %341 = sbr.rel (%p339) target = $region82
        $region81: #{tpu_custom_call.1} parent=69 // pred_region
          %v342 = vld [vmem:[%s2] sm:$0x3]
          %v343 = vld [vmem:[#allocation2] sm:$0xf]
          %v344 = vmul.f32 %v343, 0.025
          %v345 = vld [vmem:[%s1] sm:$0xff]
          %v346 = vld [vmem:[%s1 + $0x8] sm:$0xff]
          %v347 = vld [vmem:[%s1 + $0x10] sm:$0x7f]
          %v348 = vlaneseq
          %v349 = vshrl.u32 %v348, 7
          %v350 = vsub.s32 0, %v349
          %v351 = vrot.slane %v342, %v350
          %v353 = vsel %vm287, %v344, 0
          %vm355 = vcmask 1046528
          %v357 = vsel %vm355, %v347, 0
          %359 = vmatprep.subr.mxu0 0.0
          %360 = vmatpush1.msra.mxu0 0.0
          %361 = vmatprep.subr.mxu0 0.0
          %362 = vmatpush1.msra.mxu0 0.0
          %363 = vmatprep.subr.mxu0 0.0
          %364 = vmatpush1.msra.mxu0 0.0
          %365 = vmatprep.subr.mxu0 0.0
          %366 = vmatpush1.msra.mxu0 0.0
          %367 = vmatprep.subr.mxu0 0.0
          %368 = vmatpush1.msra.mxu0 0.0
          %369 = vmatprep.subr.mxu0 0.0
          %370 = vmatpush1.msra.mxu0 0.0
          %371 = vmatprep.subr.mxu0 0.0
          %372 = vmatpush1.msra.mxu0 0.0
          %373 = vmatprep.subr.mxu0 0.0
          %374 = vmatpush1.msra.mxu0 0.0
          %375 = vmatprep.subr.mxu0 0.0
          %376 = vmatpush1.msra.mxu0 0.0
          %377 = vmatprep.subr.mxu0 0.0
          %378 = vmatpush1.msra.mxu0 0.0
          %379 = vmatprep.subr.mxu0 0.0
          %380 = vmatpush1.msra.mxu0 0.0
          %381 = vmatprep.subr.mxu0 0.0
          %382 = vmatpush1.msra.mxu0 0.0
          %383 = vmatprep.subr.mxu0 0.0
          %384 = vmatpush1.msra.mxu0 0.0
          %385 = vmatprep.subr.mxu0 0.0
          %386 = vmatpush1.msra.mxu0 %v357
          %387 = vmatprep.subr.mxu0 0.0
          %388 = vmatpush1.msra.mxu0 %v346
          %389 = vmatprep.subr.mxu0 0.0
          %390 = vmatpush1.msra.mxu0 %v345
          %391 = vmatprep.subr.mxu0 0.0
          %392 = vmatpush2.msra.mxu0 0.0
          %393 = vmatprep.subr.mxu0 0.0
          %394 = vmatpush2.msra.mxu0 0.0
          %395 = vmatprep.subr.mxu0 0.0
          %396 = vmatpush2.msra.mxu0 0.0
          %397 = vmatprep.subr.mxu0 0.0
          %398 = vmatpush2.msra.mxu0 0.0
          %399 = vmatprep.subr.mxu0 0.0
          %400 = vmatpush2.msra.mxu0 0.0
          %401 = vmatprep.subr.mxu0 0.0
          %402 = vmatpush2.msra.mxu0 0.0
          %403 = vmatprep.subr.mxu0 0.0
          %404 = vmatpush2.msra.mxu0 0.0
          %405 = vmatprep.subr.mxu0 0.0
          %406 = vmatpush2.msra.mxu0 0.0
          %407 = vmatprep.subr.mxu0 0.0
          %408 = vmatpush2.msra.mxu0 0.0
          %409 = vmatprep.subr.mxu0 0.0
          %410 = vmatpush2.msra.mxu0 0.0
          %411 = vmatprep.subr.mxu0 0.0
          %412 = vmatpush2.msra.mxu0 0.0
          %413 = vmatprep.subr.mxu0 0.0
          %414 = vmatpush2.msra.mxu0 0.0
          %415 = vmatprep.subr.mxu0 0.0
          %416 = vmatpush2.msra.mxu0 0.0
          %417 = vmatprep.subr.mxu0 0.0
          %418 = vmatpush2.msra.mxu0 0.0
          %419 = vmatprep.subr.mxu0 0.0
          %420 = vmatpush2.msra.mxu0 0.0
          %421 = vmatprep.subr.mxu0 0.0
          %422 = vmatpush2.msra.mxu0 0.0
          %423 = vmatprep.mubr.f32.mxu0 0.0
          %424 = vmatmul.mubr.f32.gmra.mxu0 %v353
          %v425 = vpop.f32.mrf.mxu0
          %v426 = vadd.f32 %v351, %v425
          %v427 = vpop.f32.mrf.mxu0
          %428 = vdwg.mxu0
          %v429 = vmax.f32 %v426, 0.0
          %v430 = vld [vmem:[%s3] sm:$0xff]
          %v431 = vld [vmem:[%s3 + $0x8] sm:$0xff]
          %v432 = vld [vmem:[%s3 + $0x10] sm:$0xff]
          %v433 = vld [vmem:[%s3 + $0x18] sm:$0xff]
          %v434 = vlaneseq
          %v435 = vshrl.u32 %v434, 7
          %v436 = vsub.s32 1, %v435
          %v437 = vrot.slane %v342, %v436
          %vm438 = vcmask 261120
          %v440 = vsel %vm438, %v429, 0
          %442 = vmatprep.subr.mxu0 0.0
          %443 = vmatpush1.msra.mxu0 0.0
          %444 = vmatprep.subr.mxu0 0.0
          %445 = vmatpush1.msra.mxu0 0.0
          %446 = vmatprep.subr.mxu0 0.0
          %447 = vmatpush1.msra.mxu0 0.0
          %448 = vmatprep.subr.mxu0 0.0
          %449 = vmatpush1.msra.mxu0 0.0
          %450 = vmatprep.subr.mxu0 0.0
          %451 = vmatpush1.msra.mxu0 0.0
          %452 = vmatprep.subr.mxu0 0.0
          %453 = vmatpush1.msra.mxu0 0.0
          %454 = vmatprep.subr.mxu0 0.0
          %455 = vmatpush1.msra.mxu0 0.0
          %456 = vmatprep.subr.mxu0 0.0
          %457 = vmatpush1.msra.mxu0 0.0
          %458 = vmatprep.subr.mxu0 0.0
          %459 = vmatpush1.msra.mxu0 0.0
          %460 = vmatprep.subr.mxu0 0.0
          %461 = vmatpush1.msra.mxu0 0.0
          %462 = vmatprep.subr.mxu0 0.0
          %463 = vmatpush1.msra.mxu0 0.0
          %464 = vmatprep.subr.mxu0 0.0
          %465 = vmatpush1.msra.mxu0 0.0
          %466 = vmatprep.subr.mxu0 0.0
          %467 = vmatpush1.msra.mxu0 %v433
          %468 = vmatprep.subr.mxu0 0.0
          %469 = vmatpush1.msra.mxu0 %v432
          %470 = vmatprep.subr.mxu0 0.0
          %471 = vmatpush1.msra.mxu0 %v431
          %472 = vmatprep.subr.mxu0 0.0
          %473 = vmatpush1.msra.mxu0 %v430
          %474 = vmatprep.subr.mxu0 0.0
          %475 = vmatpush2.msra.mxu0 0.0
          %476 = vmatprep.subr.mxu0 0.0
          %477 = vmatpush2.msra.mxu0 0.0
          %478 = vmatprep.subr.mxu0 0.0
          %479 = vmatpush2.msra.mxu0 0.0
          %480 = vmatprep.subr.mxu0 0.0
          %481 = vmatpush2.msra.mxu0 0.0
          %482 = vmatprep.subr.mxu0 0.0
          %483 = vmatpush2.msra.mxu0 0.0
          %484 = vmatprep.subr.mxu0 0.0
          %485 = vmatpush2.msra.mxu0 0.0
          %486 = vmatprep.subr.mxu0 0.0
          %487 = vmatpush2.msra.mxu0 0.0
          %488 = vmatprep.subr.mxu0 0.0
          %489 = vmatpush2.msra.mxu0 0.0
          %490 = vmatprep.subr.mxu0 0.0
          %491 = vmatpush2.msra.mxu0 0.0
          %492 = vmatprep.subr.mxu0 0.0
          %493 = vmatpush2.msra.mxu0 0.0
          %494 = vmatprep.subr.mxu0 0.0
          %495 = vmatpush2.msra.mxu0 0.0
          %496 = vmatprep.subr.mxu0 0.0
          %497 = vmatpush2.msra.mxu0 0.0
          %498 = vmatprep.subr.mxu0 0.0
          %499 = vmatpush2.msra.mxu0 0.0
          %500 = vmatprep.subr.mxu0 0.0
          %501 = vmatpush2.msra.mxu0 0.0
          %502 = vmatprep.subr.mxu0 0.0
          %503 = vmatpush2.msra.mxu0 0.0
          %504 = vmatprep.subr.mxu0 0.0
          %505 = vmatpush2.msra.mxu0 0.0
          %506 = vmatprep.mubr.f32.mxu0 0.0
          %507 = vmatmul.mubr.f32.gmra.mxu0 %v440
          %v508 = vpop.f32.mrf.mxu0
          %v509 = vadd.f32 %v437, %v508
          %v510 = vpop.f32.mrf.mxu0
          %511 = vdwg.mxu0
          %vm512 = vcmask 27648
          %513 = vst.msk [vmem:[#allocation4] sm:$0xf] %vm512, %v509
        $region82: #{tpu_custom_call.1} parent=69 // pred_fallthru
          _
        // Predicated region
        $region83: #{tpu_custom_call.1} parent=69 // pred_check
          %p514 = pneg %p137
        $region84: #{tpu_custom_call.1} parent=69 // pred_check_branch
          %516 = sbr.rel (%p514) target = $region86
        $region85: #{tpu_custom_call.1} parent=69 // pred_region
          %s518 = ssub.s32 64, 64
          %519 = vsyncadd [#allocation5], %s518
          %s520 = smul.addr %s20, 64
          %s521 = scalar_lea.hbm %s4, %s520
          %s523 = sshll.u32 [#allocation4], 4
          %s524 = int_to_ptr.vmem [resolvable:$true] %s523
          %526 = dma.vmem_to_hbm [thread:$0]  %s524, 64, %s521, [#allocation5]
        $region86: #{tpu_custom_call.1} parent=69 // pred_fallthru
          _
        // Predicated region
        $region87: #{tpu_custom_call.1} parent=69 // pred_check
          %p527 = pneg %p137
        $region88: #{tpu_custom_call.1} parent=69 // pred_check_branch
          %529 = sbr.rel (%p527) target = $region90
        $region89: #{tpu_custom_call.1} parent=69 // pred_region
          %530 = dma.done [#allocation5], 64
        $region90: #{tpu_custom_call.1} parent=69 // pred_fallthru
          _
      $region70: #{tpu_custom_call.1} parent=5 // pred_fallthru
        _
      %p531 = scmp.le.s32.totalorder 2, %s11
      // Predicated region
      $region91: #{tpu_custom_call.1} parent=5 // pred_check
        %p532 = pneg %p531
      $region92: #{tpu_custom_call.1} parent=5 // pred_check_branch
        %534 = sbr.rel (%p532) target = $region94
      $region93: #{tpu_custom_call.1} parent=5 // pred_region
        %s535 = ssub.s32 %s11, 2
      $region94: #{tpu_custom_call.1} parent=5 // pred_fallthru
        _
    $region6: #{tpu_custom_call.1} parent=1 // loop_footer
      %s15 = sadd.s32 1, %s11
    $region7: #{tpu_custom_call.1} parent=1 // loop_footer_branch
      %10 = sbr.rel target = $region3
    $region8: #{tpu_custom_call.1} parent=1 // loop_exit
      _
    %536 = vsyncpa [#allocation5], 1
    %s537 = scalar_lea.sflag [#allocation5], 1
    %538 = vsyncpa %s537, 1

</llo_original>
